<compile_context>
chip_gen: v6e
topology: v6e:2x2x1
jax: 0.10.0
libtpu: 0.0.40
codegen_flags: <defaults>
</compile_context>

<pallas_src>
import functools

import jax
import jax.numpy as jnp
from jax.experimental import pallas as pl
from jax.experimental.pallas import tpu as pltpu

HIDDEN = 32          # logical hidden_size (small, per instructions)
VOCAB = 16           # logical output_size
HP = 128             # hidden padded to one full 128-lane block
VP = 128             # vocab padded to one full 128-lane block
NEG_INF = -1e30      # bias for padded vocab columns (kills them in max/exp/argmax)


# ----------------------------------------------------------------------------
# Kernel: T fused greedy-decode steps, weights resident in VMEM.
# ----------------------------------------------------------------------------
def decode_kernel(tok_ref, h0_ref, wcat_ref, bcat_ref, wout_ref, bout_ref,
                  logp_ref, hfin_ref, xh_ref, *, T, HP, VP, UNROLL):
    # Hoisted constant (one vreg).
    lane = jax.lax.broadcasted_iota(jnp.int32, (1, VP), 1)

    # Initial input token as a one-hot row (SMEM scalar -> vector compare),
    # written together with h0 into the persistent (1, VP+HP) MXU operand.
    xh_ref[:, 0:VP] = (lane == tok_ref[0]).astype(jnp.float32)
    xh_ref[:, VP:VP + HP] = h0_ref[...]

    def step(t, h):
        # Single fused matmul: [onehot | h] @ Wcat + bcat
        #   column blocks: [r_sum | z_sum | n_x | n_h]
        # (embedding lookup + relu are pre-folded into the onehot row block)
        g = jnp.dot(xh_ref[...], wcat_ref[...],
                    preferred_element_type=jnp.float32) + bcat_ref[...]  # (1, 4*HP)

        r = jax.nn.sigmoid(g[:, 0:HP])                          # r-gate (pre-summed)
        z = jax.nn.sigmoid(g[:, HP:2 * HP])                     # z-gate (pre-summed)
        n = jnp.tanh(g[:, 2 * HP:3 * HP] + r * g[:, 3 * HP:4 * HP])
        h_new = (1.0 - z) * n + z * h                           # (1, HP)

        # Output projection; store RAW logits (log_softmax deferred post-loop).
        logits = jnp.dot(h_new, wout_ref[...],
                         preferred_element_type=jnp.float32) + bout_ref[...]  # (1, VP)
        logp_ref[pl.ds(t, 1), :] = logits

        # Greedy next token (argmax, lowest-index tie-break), kept as a one-hot.
        m = jnp.max(logits, axis=1, keepdims=True)
        is_max = logits >= m
        min_idx = jnp.min(jnp.where(is_max, lane, VP), axis=1, keepdims=True)
        xh_ref[:, 0:VP] = (lane == min_idx).astype(jnp.float32)
        xh_ref[:, VP:VP + HP] = h_new
        return h_new

    h_final = jax.lax.fori_loop(0, T, step, h0_ref[...], unroll=UNROLL)
    hfin_ref[...] = h_final

    # Batched log_softmax over the whole (T, VP) logits buffer (dense tiles,
    # off the recurrent critical path).  Padded columns carry NEG_INF bias so
    # max/exp/sum are unaffected.
    logits_all = logp_ref[...]                                   # (T, VP)
    mx = jnp.max(logits_all, axis=1, keepdims=True)
    lse = mx + jnp.log(jnp.sum(jnp.exp(logits_all - mx), axis=1, keepdims=True))
    logp_ref[...] = logits_all - lse


# ----------------------------------------------------------------------------
# Wrappers
# ----------------------------------------------------------------------------
def decoder_greedy_decode(token_id, hidden, packed, T):
    """Run T fused greedy-decode steps in one pallas_call.

    token_id: (1,) int32; hidden: (1,1,H) f32
    returns: log-probs (T, V) f32, final hidden (1,1,H) f32
    """
    h0 = jnp.zeros((1, HP), jnp.float32).at[:, :HIDDEN].set(hidden.reshape(1, HIDDEN))
    logp_p, h_p = pl.pallas_call(
        functools.partial(decode_kernel, T=T, HP=HP, VP=VP, UNROLL=min(T, 8)),
        out_shape=(jax.ShapeDtypeStruct((T, VP), jnp.float32),
                   jax.ShapeDtypeStruct((1, HP), jnp.float32)),
        in_specs=[pl.BlockSpec(memory_space=pltpu.MemorySpace.SMEM)]   # token id scalar
                 + [pl.BlockSpec(memory_space=pltpu.MemorySpace.VMEM)] * 5,
        out_specs=(pl.BlockSpec(memory_space=pltpu.MemorySpace.VMEM),
                   pl.BlockSpec(memory_space=pltpu.MemorySpace.VMEM)),
        scratch_shapes=[pltpu.VMEM((1, VP + HP), jnp.float32)],        # [onehot | h]
    )(token_id.astype(jnp.int32), h0,
      packed["w_cat"], packed["b_cat"], packed["w_out_p"], packed["b_out_p"])
    return logp_p[:, :VOCAB], h_p[:, :HIDDEN].reshape(1, 1, HIDDEN)


def decoder_rnn_forward(token_id, hidden, packed):
    """Single-step module forward (T=1 specialization of the fused kernel)."""
    logp, h_new = decoder_greedy_decode(token_id, hidden, packed, T=1)
    return logp, h_new


# ----------------------------------------------------------------------------
# Parameter init (PyTorch-layout) and one-time packing/padding for the kernel.
# ----------------------------------------------------------------------------
def init_params(key, hidden_size, output_size):
    """Deterministic synthetic init matching the module's parameter shapes."""
    k_emb, k_ih, k_hh, k_out = jax.random.split(key, 4)
    emb = 0.1 * jax.random.normal(k_emb, (output_size, hidden_size), jnp.float32)
    w_ih = jax.random.normal(k_ih, (3 * hidden_size, hidden_size), jnp.float32) \
        * (2.0 / (4 * hidden_size)) ** 0.5
    w_hh = jax.random.normal(k_hh, (3 * hidden_size, hidden_size), jnp.float32) \
        * (1.0 / hidden_size) ** 0.5
    b_ih = jnp.full((3 * hidden_size,), 0.01, jnp.float32)
    b_hh = jnp.full((3 * hidden_size,), 0.01, jnp.float32)
    w_out = 0.1 * jax.random.normal(k_out, (output_size, hidden_size), jnp.float32) \
        * (6.0 / (hidden_size + output_size)) ** 0.5
    b_out = jnp.full((output_size,), 0.01, jnp.float32)
    return {"emb": emb, "w_ih": w_ih, "w_hh": w_hh,
            "b_ih": b_ih, "b_hh": b_hh, "w_out": w_out, "b_out": b_out}


def pack_params(p):
    """Pre-fold relu(embedding) into the gate weights, pre-transpose/pad once.

    w_cat rows:    [0:VP]  -> one-hot (vocab) contribution = relu(emb) @ W_ih.T
                   [VP: ]  -> hidden contribution          = W_hh.T
    w_cat columns: [r_sum | z_sum | n_x | n_h], each padded to 128 lanes.
    """
    H, V = HIDDEN, VOCAB
    emb_relu = jnp.maximum(p["emb"], 0.0)          # relu folded into the table
    w_ih_t = p["w_ih"].T                            # (H, 3H), gate order [r | z | n]
    w_hh_t = p["w_hh"].T                            # (H, 3H)
    e_ih = emb_relu @ w_ih_t                        # (V, 3H): embedding fused with W_ih

    w_cat = jnp.zeros((VP + HP, 4 * HP), jnp.float32)
    # column block 0: r (onehot and h contributions pre-summed by the matmul)
    w_cat = w_cat.at[0:V, 0:H].set(e_ih[:, 0:H])
    w_cat = w_cat.at[VP:VP + H, 0:H].set(w_hh_t[:, 0:H])
    # column block 1: z
    w_cat = w_cat.at[0:V, HP:HP + H].set(e_ih[:, H:2 * H])
    w_cat = w_cat.at[VP:VP + H, HP:HP + H].set(w_hh_t[:, H:2 * H])
    # column block 2: n_x (input/embedding part only)
    w_cat = w_cat.at[0:V, 2 * HP:2 * HP + H].set(e_ih[:, 2 * H:3 * H])
    # column block 3: n_h (hidden part only)
    w_cat = w_cat.at[VP:VP + H, 3 * HP:3 * HP + H].set(w_hh_t[:, 2 * H:3 * H])

    b_cat = jnp.zeros((1, 4 * HP), jnp.float32)
    b_cat = b_cat.at[0, 0:H].set(p["b_ih"][0:H] + p["b_hh"][0:H])
    b_cat = b_cat.at[0, HP:HP + H].set(p["b_ih"][H:2 * H] + p["b_hh"][H:2 * H])
    b_cat = b_cat.at[0, 2 * HP:2 * HP + H].set(p["b_ih"][2 * H:3 * H])
    b_cat = b_cat.at[0, 3 * HP:3 * HP + H].set(p["b_hh"][2 * H:3 * H])

    w_out_p = jnp.zeros((HP, VP), jnp.float32).at[:H, :V].set(p["w_out"].T)
    b_out_p = jnp.full((1, VP), NEG_INF, jnp.float32).at[0, :V].set(p["b_out"])
    return {"w_cat": w_cat, "b_cat": b_cat, "w_out_p": w_out_p, "b_out_p": b_out_p}


# ----------------------------------------------------------------------------
# Pure-JAX reference (mirrors the PyTorch forward exactly).
# ----------------------------------------------------------------------------
def reference_step(token, hidden, p):
    H = HIDDEN
    x = jnp.maximum(p["emb"][token][None, :], 0.0)
    h = hidden.reshape(1, H)
    gx = x @ p["w_ih"].T + p["b_ih"][None, :]
    gh = h @ p["w_hh"].T + p["b_hh"][None, :]
    r = jax.nn.sigmoid(gx[:, 0:H] + gh[:, 0:H])
    z = jax.nn.sigmoid(gx[:, H:2 * H] + gh[:, H:2 * H])
    n = jnp.tanh(gx[:, 2 * H:3 * H] + r * gh[:, 2 * H:3 * H])
    h_new = (1.0 - z) * n + z * h
    logits = h_new @ p["w_out"].T + p["b_out"][None, :]
    logp = logits - jax.scipy.special.logsumexp(logits, axis=1, keepdims=True)
    return logp, h_new.reshape(1, 1, H)


def reference_decode(token_id, hidden, p, T):
    tok = int(token_id[0])
    h = hidden
    logps = []
    for _ in range(T):
        logp, h = reference_step(tok, h, p)
        logps.append(logp)
        tok = int(jnp.argmax(logp[0]))
    return jnp.concatenate(logps, axis=0), h


# ----------------------------------------------------------------------------
if __name__ == "__main__":
    key = jax.random.PRNGKey(0)
    params = init_params(key, HIDDEN, VOCAB)
    packed = pack_params(params)

    token_id = jnp.array([3], dtype=jnp.int32)            # decoder input token
    hidden0 = jnp.zeros((1, 1, HIDDEN), jnp.float32)      # initHidden()

    # --- single-step forward (module semantics) ---
    logp1, h1 = decoder_rnn_forward(token_id, hidden0, packed)
    jax.block_until_ready((logp1, h1))
    logp1_ref, h1_ref = reference_step(int(token_id[0]), hidden0, params)
    assert logp1.shape == (1, VOCAB) and h1.shape == (1, 1, HIDDEN)
    assert jnp.allclose(logp1, logp1_ref, atol=1e-4, rtol=1e-4)
    assert jnp.allclose(h1, h1_ref, atol=1e-4, rtol=1e-4)

    # --- fused T-step greedy decode (one pallas_call for all steps) ---
    T = 8
    logpT, hT = decoder_greedy_decode(token_id, hidden0, packed, T)
    jax.block_until_ready((logpT, hT))
    logpT_ref, hT_ref = reference_decode(token_id, hidden0, params, T)
    assert logpT.shape == (T, VOCAB) and hT.shape == (1, 1, HIDDEN)
    assert jnp.array_equal(jnp.argmax(logpT, axis=1), jnp.argmax(logpT_ref, axis=1))
    assert jnp.allclose(logpT, logpT_ref, atol=1e-4, rtol=1e-4)
    assert jnp.allclose(hT, hT_ref, atol=1e-4, rtol=1e-4)

    print("KERNEL_OK")
</pallas_src>

<mosaic_0001>
module attributes {stable_mosaic.version = 11 : i64} {
  func.func @decode_kernel(%arg0: memref<1xi32, #tpu.memory_space<smem>>, %arg1: memref<1x128xf32, #tpu.memory_space<vmem>>, %arg2: memref<256x512xf32, #tpu.memory_space<vmem>>, %arg3: memref<1x512xf32, #tpu.memory_space<vmem>>, %arg4: memref<128x128xf32, #tpu.memory_space<vmem>>, %arg5: memref<1x128xf32, #tpu.memory_space<vmem>>, %arg6: memref<1x128xf32, #tpu.memory_space<vmem>>, %arg7: memref<1x128xf32, #tpu.memory_space<vmem>>, %arg8: memref<1x256xf32, #tpu.memory_space<vmem>>) attributes {dimension_semantics = [], scalar_prefetch = 0 : i64, scratch_operands = 1 : i64, tpu.core_type = #tpu.core_type<tc>} {
    %0 = tpu.iota {dimensions = array<i32: 1>} : vector<1x128xi32>
    %c0 = arith.constant 0 : index
    %1 = memref.load %arg0[%c0] : memref<1xi32, #tpu.memory_space<smem>>
    %2 = vector.broadcast %1 : i32 to vector<1x128xi32>
    %3 = arith.cmpi eq, %0, %2 : vector<1x128xi32>
    %4 = arith.extui %3 : vector<1x128xi1> to vector<1x128xi32>
    %5 = arith.sitofp %4 : vector<1x128xi32> to vector<1x128xf32>
    %c0_0 = arith.constant 0 : index
    %c0_1 = arith.constant 0 : index
    %6 = vector.load %arg8[%c0_0, %c0_1] : memref<1x256xf32, #tpu.memory_space<vmem>>, vector<1x128xf32>
    tpu.vector_store %arg8[%c0_0, %c0_1], %5 {strides = array<i32>} : memref<1x256xf32, #tpu.memory_space<vmem>>, vector<1x128xf32>,
    %c0_2 = arith.constant 0 : index
    %c0_3 = arith.constant 0 : index
    %7 = vector.load %arg1[%c0_2, %c0_3] : memref<1x128xf32, #tpu.memory_space<vmem>>, vector<1x128xf32>
    %c0_4 = arith.constant 0 : index
    %c128 = arith.constant 128 : index
    %8 = vector.load %arg8[%c0_4, %c128] : memref<1x256xf32, #tpu.memory_space<vmem>>, vector<1x128xf32>
    tpu.vector_store %arg8[%c0_4, %c128], %7 {strides = array<i32>} : memref<1x256xf32, #tpu.memory_space<vmem>>, vector<1x128xf32>,
    %c0_5 = arith.constant 0 : index
    %c0_6 = arith.constant 0 : index
    %9 = vector.load %arg1[%c0_5, %c0_6] : memref<1x128xf32, #tpu.memory_space<vmem>>, vector<1x128xf32>
    %c0_i32 = arith.constant 0 : i32
    %c0_7 = arith.constant 0 : index
    %c0_8 = arith.constant 0 : index
    %10 = vector.load %arg8[%c0_7, %c0_8] : memref<1x256xf32, #tpu.memory_space<vmem>>, vector<1x256xf32>
    %c0_9 = arith.constant 0 : index
    %c0_10 = arith.constant 0 : index
    %11 = vector.load %arg2[%c0_9, %c0_10] : memref<256x512xf32, #tpu.memory_space<vmem>>, vector<256x512xf32>
    %cst = arith.constant dense<0.000000e+00> : vector<1x512xf32>
    %12 = tpu.matmul %10, %11, %cst {dimension_numbers = #tpu.dot_dimension_numbers<[1], [0], [0], [1], [0, 0, 1, 1], [], []>} : vector<1x256xf32>, vector<256x512xf32>, vector<1x512xf32> -> vector<1x512xf32>
    %c0_11 = arith.constant 0 : index
    %c0_12 = arith.constant 0 : index
    %13 = vector.load %arg3[%c0_11, %c0_12] : memref<1x512xf32, #tpu.memory_space<vmem>>, vector<1x512xf32>
    %14 = arith.addf %12, %13 : vector<1x512xf32>
    %15 = vector.extract_strided_slice %14 {offsets = [0, 0], sizes = [1, 128], strides = [1, 1]} : vector<1x512xf32> to vector<1x128xf32>
    %16 = arith.negf %15 : vector<1x128xf32>
    %17 = math.exp %16 : vector<1x128xf32>
    %cst_13 = arith.constant 1.000000e+00 : f32
    %18 = vector.broadcast %cst_13 : f32 to vector<1x128xf32>
    %19 = arith.addf %18, %17 : vector<1x128xf32>
    %20 = arith.divf %18, %19 : vector<1x128xf32>
    %21 = vector.extract_strided_slice %14 {offsets = [0, 128], sizes = [1, 128], strides = [1, 1]} : vector<1x512xf32> to vector<1x128xf32>
    %22 = arith.negf %21 : vector<1x128xf32>
    %23 = math.exp %22 : vector<1x128xf32>
    %cst_14 = arith.constant 1.000000e+00 : f32
    %24 = vector.broadcast %cst_14 : f32 to vector<1x128xf32>
    %25 = arith.addf %24, %23 : vector<1x128xf32>
    %26 = arith.divf %24, %25 : vector<1x128xf32>
    %27 = vector.extract_strided_slice %14 {offsets = [0, 256], sizes = [1, 128], strides = [1, 1]} : vector<1x512xf32> to vector<1x128xf32>
    %28 = vector.extract_strided_slice %14 {offsets = [0, 384], sizes = [1, 128], strides = [1, 1]} : vector<1x512xf32> to vector<1x128xf32>
    %29 = arith.mulf %20, %28 : vector<1x128xf32>
    %30 = arith.addf %27, %29 : vector<1x128xf32>
    %31 = math.tanh %30 : vector<1x128xf32>
    %cst_15 = arith.constant 1.000000e+00 : f32
    %32 = vector.broadcast %cst_15 : f32 to vector<1x128xf32>
    %33 = arith.subf %32, %26 : vector<1x128xf32>
    %34 = arith.mulf %33, %31 : vector<1x128xf32>
    %35 = arith.mulf %26, %9 : vector<1x128xf32>
    %36 = arith.addf %34, %35 : vector<1x128xf32>
    %c0_16 = arith.constant 0 : index
    %c0_17 = arith.constant 0 : index
    %37 = vector.load %arg4[%c0_16, %c0_17] : memref<128x128xf32, #tpu.memory_space<vmem>>, vector<128x128xf32>
    %cst_18 = arith.constant dense<0.000000e+00> : vector<1x128xf32>
    %38 = tpu.matmul %36, %37, %cst_18 {dimension_numbers = #tpu.dot_dimension_numbers<[1], [0], [0], [1], [0, 0, 1, 1], [], []>} : vector<1x128xf32>, vector<128x128xf32>, vector<1x128xf32> -> vector<1x128xf32>
    %c0_19 = arith.constant 0 : index
    %c0_20 = arith.constant 0 : index
    %39 = vector.load %arg5[%c0_19, %c0_20] : memref<1x128xf32, #tpu.memory_space<vmem>>, vector<1x128xf32>
    %40 = arith.addf %38, %39 : vector<1x128xf32>
    %41 = arith.index_cast %c0_i32 : i32 to index
    %c0_21 = arith.constant 0 : index
    %42 = vector.load %arg6[%41, %c0_21] : memref<1x128xf32, #tpu.memory_space<vmem>>, vector<1x128xf32>
    tpu.vector_store %arg6[%41, %c0_21], %40 {strides = array<i32>} : memref<1x128xf32, #tpu.memory_space<vmem>>, vector<1x128xf32>,
    %cst_22 = arith.constant dense<0xFF800000> : vector<1xf32>
    %43 = vector.multi_reduction <maximumf>, %40, %cst_22 [1] : vector<1x128xf32> to vector<1xf32>
    %44 = vector.shape_cast %43 : vector<1xf32> to vector<1x1xf32>
    %45 = vector.broadcast %44 : vector<1x1xf32> to vector<1x128xf32>
    %46 = arith.cmpf oge, %40, %45 : vector<1x128xf32>
    %c128_i32 = arith.constant 128 : i32
    %47 = vector.broadcast %c128_i32 : i32 to vector<1x128xi32>
    %48 = arith.select %46, %0, %47 : vector<1x128xi1>, vector<1x128xi32>
    %cst_23 = arith.constant dense<2147483647> : vector<1xi32>
    %49 = vector.multi_reduction <minsi>, %48, %cst_23 [1] : vector<1x128xi32> to vector<1xi32>
    %50 = vector.shape_cast %49 : vector<1xi32> to vector<1x1xi32>
    %51 = vector.broadcast %50 : vector<1x1xi32> to vector<1x128xi32>
    %52 = arith.cmpi eq, %0, %51 : vector<1x128xi32>
    %53 = arith.extui %52 : vector<1x128xi1> to vector<1x128xi32>
    %54 = arith.sitofp %53 : vector<1x128xi32> to vector<1x128xf32>
    %c0_24 = arith.constant 0 : index
    %c0_25 = arith.constant 0 : index
    %55 = vector.load %arg8[%c0_24, %c0_25] : memref<1x256xf32, #tpu.memory_space<vmem>>, vector<1x128xf32>
    tpu.vector_store %arg8[%c0_24, %c0_25], %54 {strides = array<i32>} : memref<1x256xf32, #tpu.memory_space<vmem>>, vector<1x128xf32>,
    %c0_26 = arith.constant 0 : index
    %c128_27 = arith.constant 128 : index
    %56 = vector.load %arg8[%c0_26, %c128_27] : memref<1x256xf32, #tpu.memory_space<vmem>>, vector<1x128xf32>
    tpu.vector_store %arg8[%c0_26, %c128_27], %36 {strides = array<i32>} : memref<1x256xf32, #tpu.memory_space<vmem>>, vector<1x128xf32>,
    %c1_i32 = arith.constant 1 : i32
    %c0_28 = arith.constant 0 : index
    %c0_29 = arith.constant 0 : index
    %57 = vector.load %arg7[%c0_28, %c0_29] : memref<1x128xf32, #tpu.memory_space<vmem>>, vector<1x128xf32>
    tpu.vector_store %arg7[%c0_28, %c0_29], %36 {strides = array<i32>} : memref<1x128xf32, #tpu.memory_space<vmem>>, vector<1x128xf32>,
    %c0_30 = arith.constant 0 : index
    %c0_31 = arith.constant 0 : index
    %58 = vector.load %arg6[%c0_30, %c0_31] : memref<1x128xf32, #tpu.memory_space<vmem>>, vector<1x128xf32>
    %cst_32 = arith.constant dense<0xFF800000> : vector<1xf32>
    %59 = vector.multi_reduction <maximumf>, %58, %cst_32 [1] : vector<1x128xf32> to vector<1xf32>
    %60 = vector.shape_cast %59 : vector<1xf32> to vector<1x1xf32>
    %61 = vector.broadcast %60 : vector<1x1xf32> to vector<1x128xf32>
    %62 = arith.subf %58, %61 : vector<1x128xf32>
    %63 = math.exp %62 : vector<1x128xf32>
    %cst_33 = arith.constant dense<0.000000e+00> : vector<1xf32>
    %64 = vector.multi_reduction <add>, %63, %cst_33 [1] : vector<1x128xf32> to vector<1xf32>
    %65 = vector.shape_cast %64 : vector<1xf32> to vector<1x1xf32>
    %66 = math.log %65 : vector<1x1xf32>
    %67 = arith.addf %60, %66 : vector<1x1xf32>
    %68 = vector.broadcast %67 : vector<1x1xf32> to vector<1x128xf32>
    %69 = arith.subf %58, %68 : vector<1x128xf32>
    %c0_34 = arith.constant 0 : index
    %c0_35 = arith.constant 0 : index
    %70 = vector.load %arg6[%c0_34, %c0_35] : memref<1x128xf32, #tpu.memory_space<vmem>>, vector<1x128xf32>
    tpu.vector_store %arg6[%c0_34, %c0_35], %69 {strides = array<i32>} : memref<1x128xf32, #tpu.memory_space<vmem>>, vector<1x128xf32>,
    return
  }
}

</mosaic_0001>

<llo_original>
// kernel: tpu_custom_call.1
$region0: #{tpu_custom_call.1}
  #allocation0 [shape = 'u32[]', space=smem, size = 0x4, offset = 0x4, fixed_abs, tag = 'smem constant byte address 0x4 - core index']
  #allocation1 [shape = 'u32[144,128]{1,0:T(1,128)}', space=vmem, size = 0x12000, scoped, tag = 'internal scratch']
  #allocation2 [shape = 'f32[1,256]{1,0:T(1,128)}', space=vmem, size = 0x400, scoped, tag = 'scratch operand']
  #allocation3 [shape = 's32[1]{0:T(128)S(6)}', space=smem, size = 0x200, scoped, tag = 'scoped memory for tpu_custom_call.1']
  %s0 = inlined_call_operand.<no memory space> [shape: s32[1], index: 0, kind: input, shape index: {}]
  %s1 = inlined_call_operand.vmem [shape: f32[1,128], index: 1, kind: input, shape index: {}]
  %s2 = inlined_call_operand.hbm [shape: f32[256,512], index: 2, kind: input, shape index: {}]
  %s3 = inlined_call_operand.vmem [shape: f32[1,512], index: 3, kind: input, shape index: {}]
  %s4 = inlined_call_operand.hbm [shape: f32[128,128], index: 4, kind: input, shape index: {}]
  %s5 = inlined_call_operand.vmem [shape: f32[1,128], index: 5, kind: input, shape index: {}]
  %s6 = inlined_call_operand.hbm [shape: f32[1,128], index: 6, kind: output, shape index: {0}]
  %s7 = inlined_call_operand.hbm [shape: f32[1,128], index: 7, kind: output, shape index: {1}]
  %8 = xla_tuple %s6, %s7
  %s9 = sld [smem:[#allocation0]]
  $region50: #{tpu_custom_call.1} parent=0
    _
  %s11 = ssub.s32 1, %s9
  %s12 = scalar_select 0, %s11, %s9
  %13 = sst [smem:[#allocation3]] %s0
  $region1: #{tpu_custom_call.1} parent=0
    #allocation4 [shape = 'u8[524288]{0}', space=vmem, size = 0x80000, scoped, tag = 'input window, operand 2, single buffered']
    #allocation5 [shape = 's32[1]{0}', space=sflag, size = 0x4, scoped, tag = 'scoped memory for tpu_custom_call.1']
    #allocation6 [shape = 's32[1]{0}', space=sflag, size = 0x4, scoped, tag = 'scoped memory for tpu_custom_call.1']
    #allocation7 [shape = 'u8[65536]{0}', space=vmem, size = 0x10000, scoped, tag = 'input window, operand 4, single buffered']
    #allocation8 [shape = 's32[1]{0}', space=sflag, size = 0x4, scoped, tag = 'scoped memory for tpu_custom_call.1']
    #allocation9 [shape = 'u8[512]{0}', space=vmem, size = 0x400, scoped, tag = 'output window, operand 0, single buffered']
    #allocation10 [shape = 'u8[512]{0}', space=vmem, size = 0x400, scoped, tag = 'output window, operand 1, single buffered']
    #allocation11 [shape = 's32[1]{0}', space=sflag, size = 0x4, scoped, tag = 'scoped memory for tpu_custom_call.1']
    %14 = vsyncpa [#allocation5], 0
    %15 = vsyncpa [#allocation8], 0
    %16 = vsyncpa [#allocation6], 0
    %17 = vsyncpa [#allocation11], 0
    // Predicated region
    $region2: #{tpu_custom_call.1} parent=1 // pred_check
      _
    $region3: #{tpu_custom_call.1} parent=1 // pred_check_branch
      %19 = sbr.rel (0) target = $region5
    $region4: #{tpu_custom_call.1} parent=1 // pred_region
      _
    $region5: #{tpu_custom_call.1} parent=1 // pred_fallthru
      _
    // Predicated region
    $region6: #{tpu_custom_call.1} parent=1 // pred_check
      _
    $region7: #{tpu_custom_call.1} parent=1 // pred_check_branch
      %21 = sbr.rel (0) target = $region9
    $region8: #{tpu_custom_call.1} parent=1 // pred_region
      _
    $region9: #{tpu_custom_call.1} parent=1 // pred_fallthru
      _
    // Predicated region
    $region10: #{tpu_custom_call.1} parent=1 // pred_check
      _
    $region11: #{tpu_custom_call.1} parent=1 // pred_check_branch
      %23 = sbr.rel (0) target = $region13
    $region12: #{tpu_custom_call.1} parent=1 // pred_region
      %s25 = ssub.s32 16384, 16384
      %26 = vsyncadd [#allocation5], %s25
      %s27 = sshll.u32 [#allocation4], 4
      %s28 = int_to_ptr.vmem [resolvable:$true] %s27
      %33 = dma.hbm_to_vmem [thread:$0]  %s2, 16384, %s28, [#allocation5], 512, 512, 32
    $region13: #{tpu_custom_call.1} parent=1 // pred_fallthru
      _
    // Predicated region
    $region14: #{tpu_custom_call.1} parent=1 // pred_check
      _
    $region15: #{tpu_custom_call.1} parent=1 // pred_check_branch
      %35 = sbr.rel (0) target = $region17
    $region16: #{tpu_custom_call.1} parent=1 // pred_region
      _
    $region17: #{tpu_custom_call.1} parent=1 // pred_fallthru
      _
    // Predicated region
    $region18: #{tpu_custom_call.1} parent=1 // pred_check
      _
    $region19: #{tpu_custom_call.1} parent=1 // pred_check_branch
      %37 = sbr.rel (0) target = $region21
    $region20: #{tpu_custom_call.1} parent=1 // pred_region
      %s39 = ssub.s32 2048, 2048
      %40 = vsyncadd [#allocation8], %s39
      %s41 = sshll.u32 [#allocation7], 4
      %s42 = int_to_ptr.vmem [resolvable:$true] %s41
      %47 = dma.hbm_to_vmem [thread:$0]  %s4, 2048, %s42, [#allocation8], 128, 128, 8
    $region21: #{tpu_custom_call.1} parent=1 // pred_fallthru
      _
    // Predicated region
    $region22: #{tpu_custom_call.1} parent=1 // pred_check
      _
    $region23: #{tpu_custom_call.1} parent=1 // pred_check_branch
      %49 = sbr.rel (0) target = $region25
    $region24: #{tpu_custom_call.1} parent=1 // pred_region
      _
    $region25: #{tpu_custom_call.1} parent=1 // pred_fallthru
      _
    // Predicated region
    $region26: #{tpu_custom_call.1} parent=1 // pred_check
      _
    $region27: #{tpu_custom_call.1} parent=1 // pred_check_branch
      %51 = sbr.rel (0) target = $region29
    $region28: #{tpu_custom_call.1} parent=1 // pred_region
      %52 = dma.done [#allocation5], 16384
    $region29: #{tpu_custom_call.1} parent=1 // pred_fallthru
      _
    // Predicated region
    $region30: #{tpu_custom_call.1} parent=1 // pred_check
      _
    $region31: #{tpu_custom_call.1} parent=1 // pred_check_branch
      %54 = sbr.rel (0) target = $region33
    $region32: #{tpu_custom_call.1} parent=1 // pred_region
      %55 = dma.done [#allocation8], 2048
    $region33: #{tpu_custom_call.1} parent=1 // pred_fallthru
      _
    %v56 = vlaneseq
    %v57 = vand.u32 %v56, 127
    %s58 = sld [smem:[#allocation3]]
    %v59 = vstv %s58
    %vm60 = vcmp.eq.s32.totalorder %v57, %v59
    %v61 = vsel %vm60, 1, 0
    %v62 = vcvt.s32.f32 %v61
    %v63 = vlaneseq
    %vm64 = vcmp.ge.s32.totalorder %v63, 0
    %vm65 = vcmp.lt.s32.totalorder %v63, 128
    %vm66 = vmand %vm64, %vm65
    %67 = vst.msk [vmem:[#allocation2] sm:$0x1] %vm66, %v62
    %v68 = vld [vmem:[%s1] sm:$0x1]
    %69 = vst.msk [vmem:[#allocation2 + $0x1] sm:$0x1] %vm66, %v68
    %v70 = vld [vmem:[%s1] sm:$0x1]
    %v71 = vld [vmem:[#allocation2] sm:$0x3]
    %v72 = vld [vmem:[#allocation4] sm:$0xff]
    %v73 = vld [vmem:[#allocation4 + $0x8] sm:$0xff]
    %v74 = vld [vmem:[#allocation4 + $0x10] sm:$0xff]
    %v75 = vld [vmem:[#allocation4 + $0x18] sm:$0xff]
    %v76 = vld [vmem:[#allocation4 + $0x20] sm:$0xff]
    %v77 = vld [vmem:[#allocation4 + $0x28] sm:$0xff]
    %v78 = vld [vmem:[#allocation4 + $0x30] sm:$0xff]
    %v79 = vld [vmem:[#allocation4 + $0x38] sm:$0xff]
    %v80 = vld [vmem:[#allocation4 + $0x40] sm:$0xff]
    %v81 = vld [vmem:[#allocation4 + $0x48] sm:$0xff]
    %v82 = vld [vmem:[#allocation4 + $0x50] sm:$0xff]
    %v83 = vld [vmem:[#allocation4 + $0x58] sm:$0xff]
    %v84 = vld [vmem:[#allocation4 + $0x60] sm:$0xff]
    %v85 = vld [vmem:[#allocation4 + $0x68] sm:$0xff]
    %v86 = vld [vmem:[#allocation4 + $0x70] sm:$0xff]
    %v87 = vld [vmem:[#allocation4 + $0x78] sm:$0xff]
    %v88 = vld [vmem:[#allocation4 + $0x80] sm:$0xff]
    %v89 = vld [vmem:[#allocation4 + $0x88] sm:$0xff]
    %v90 = vld [vmem:[#allocation4 + $0x90] sm:$0xff]
    %v91 = vld [vmem:[#allocation4 + $0x98] sm:$0xff]
    %v92 = vld [vmem:[#allocation4 + $0xa0] sm:$0xff]
    %v93 = vld [vmem:[#allocation4 + $0xa8] sm:$0xff]
    %v94 = vld [vmem:[#allocation4 + $0xb0] sm:$0xff]
    %v95 = vld [vmem:[#allocation4 + $0xb8] sm:$0xff]
    %v96 = vld [vmem:[#allocation4 + $0xc0] sm:$0xff]
    %v97 = vld [vmem:[#allocation4 + $0xc8] sm:$0xff]
    %v98 = vld [vmem:[#allocation4 + $0xd0] sm:$0xff]
    %v99 = vld [vmem:[#allocation4 + $0xd8] sm:$0xff]
    %v100 = vld [vmem:[#allocation4 + $0xe0] sm:$0xff]
    %v101 = vld [vmem:[#allocation4 + $0xe8] sm:$0xff]
    %v102 = vld [vmem:[#allocation4 + $0xf0] sm:$0xff]
    %v103 = vld [vmem:[#allocation4 + $0xf8] sm:$0xff]
    %v104 = vld [vmem:[#allocation4 + $0x100] sm:$0xff]
    %v105 = vld [vmem:[#allocation4 + $0x108] sm:$0xff]
    %v106 = vld [vmem:[#allocation4 + $0x110] sm:$0xff]
    %v107 = vld [vmem:[#allocation4 + $0x118] sm:$0xff]
    %v108 = vld [vmem:[#allocation4 + $0x120] sm:$0xff]
    %v109 = vld [vmem:[#allocation4 + $0x128] sm:$0xff]
    %v110 = vld [vmem:[#allocation4 + $0x130] sm:$0xff]
    %v111 = vld [vmem:[#allocation4 + $0x138] sm:$0xff]
    %v112 = vld [vmem:[#allocation4 + $0x140] sm:$0xff]
    %v113 = vld [vmem:[#allocation4 + $0x148] sm:$0xff]
    %v114 = vld [vmem:[#allocation4 + $0x150] sm:$0xff]
    %v115 = vld [vmem:[#allocation4 + $0x158] sm:$0xff]
    %v116 = vld [vmem:[#allocation4 + $0x160] sm:$0xff]
    %v117 = vld [vmem:[#allocation4 + $0x168] sm:$0xff]
    %v118 = vld [vmem:[#allocation4 + $0x170] sm:$0xff]
    %v119 = vld [vmem:[#allocation4 + $0x178] sm:$0xff]
    %v120 = vld [vmem:[#allocation4 + $0x180] sm:$0xff]
    %v121 = vld [vmem:[#allocation4 + $0x188] sm:$0xff]
    %v122 = vld [vmem:[#allocation4 + $0x190] sm:$0xff]
    %v123 = vld [vmem:[#allocation4 + $0x198] sm:$0xff]
    %v124 = vld [vmem:[#allocation4 + $0x1a0] sm:$0xff]
    %v125 = vld [vmem:[#allocation4 + $0x1a8] sm:$0xff]
    %v126 = vld [vmem:[#allocation4 + $0x1b0] sm:$0xff]
    %v127 = vld [vmem:[#allocation4 + $0x1b8] sm:$0xff]
    %v128 = vld [vmem:[#allocation4 + $0x1c0] sm:$0xff]
    %v129 = vld [vmem:[#allocation4 + $0x1c8] sm:$0xff]
    %v130 = vld [vmem:[#allocation4 + $0x1d0] sm:$0xff]
    %v131 = vld [vmem:[#allocation4 + $0x1d8] sm:$0xff]
    %v132 = vld [vmem:[#allocation4 + $0x1e0] sm:$0xff]
    %v133 = vld [vmem:[#allocation4 + $0x1e8] sm:$0xff]
    %v134 = vld [vmem:[#allocation4 + $0x1f0] sm:$0xff]
    %v135 = vld [vmem:[#allocation4 + $0x1f8] sm:$0xff]
    %v136 = vld [vmem:[#allocation4 + $0x200] sm:$0xff]
    %v137 = vld [vmem:[#allocation4 + $0x208] sm:$0xff]
    %v138 = vld [vmem:[#allocation4 + $0x210] sm:$0xff]
    %v139 = vld [vmem:[#allocation4 + $0x218] sm:$0xff]
    %v140 = vld [vmem:[#allocation4 + $0x220] sm:$0xff]
    %v141 = vld [vmem:[#allocation4 + $0x228] sm:$0xff]
    %v142 = vld [vmem:[#allocation4 + $0x230] sm:$0xff]
    %v143 = vld [vmem:[#allocation4 + $0x238] sm:$0xff]
    %v144 = vld [vmem:[#allocation4 + $0x240] sm:$0xff]
    %v145 = vld [vmem:[#allocation4 + $0x248] sm:$0xff]
    %v146 = vld [vmem:[#allocation4 + $0x250] sm:$0xff]
    %v147 = vld [vmem:[#allocation4 + $0x258] sm:$0xff]
    %v148 = vld [vmem:[#allocation4 + $0x260] sm:$0xff]
    %v149 = vld [vmem:[#allocation4 + $0x268] sm:$0xff]
    %v150 = vld [vmem:[#allocation4 + $0x270] sm:$0xff]
    %v151 = vld [vmem:[#allocation4 + $0x278] sm:$0xff]
    %v152 = vld [vmem:[#allocation4 + $0x280] sm:$0xff]
    %v153 = vld [vmem:[#allocation4 + $0x288] sm:$0xff]
    %v154 = vld [vmem:[#allocation4 + $0x290] sm:$0xff]
    %v155 = vld [vmem:[#allocation4 + $0x298] sm:$0xff]
    %v156 = vld [vmem:[#allocation4 + $0x2a0] sm:$0xff]
    %v157 = vld [vmem:[#allocation4 + $0x2a8] sm:$0xff]
    %v158 = vld [vmem:[#allocation4 + $0x2b0] sm:$0xff]
    %v159 = vld [vmem:[#allocation4 + $0x2b8] sm:$0xff]
    %v160 = vld [vmem:[#allocation4 + $0x2c0] sm:$0xff]
    %v161 = vld [vmem:[#allocation4 + $0x2c8] sm:$0xff]
    %v162 = vld [vmem:[#allocation4 + $0x2d0] sm:$0xff]
    %v163 = vld [vmem:[#allocation4 + $0x2d8] sm:$0xff]
    %v164 = vld [vmem:[#allocation4 + $0x2e0] sm:$0xff]
    %v165 = vld [vmem:[#allocation4 + $0x2e8] sm:$0xff]
    %v166 = vld [vmem:[#allocation4 + $0x2f0] sm:$0xff]
    %v167 = vld [vmem:[#allocation4 + $0x2f8] sm:$0xff]
    %v168 = vld [vmem:[#allocation4 + $0x300] sm:$0xff]
    %v169 = vld [vmem:[#allocation4 + $0x308] sm:$0xff]
    %v170 = vld [vmem:[#allocation4 + $0x310] sm:$0xff]
    %v171 = vld [vmem:[#allocation4 + $0x318] sm:$0xff]
    %v172 = vld [vmem:[#allocation4 + $0x320] sm:$0xff]
    %v173 = vld [vmem:[#allocation4 + $0x328] sm:$0xff]
    %v174 = vld [vmem:[#allocation4 + $0x330] sm:$0xff]
    %v175 = vld [vmem:[#allocation4 + $0x338] sm:$0xff]
    %v176 = vld [vmem:[#allocation4 + $0x340] sm:$0xff]
    %v177 = vld [vmem:[#allocation4 + $0x348] sm:$0xff]
    %v178 = vld [vmem:[#allocation4 + $0x350] sm:$0xff]
    %v179 = vld [vmem:[#allocation4 + $0x358] sm:$0xff]
    %v180 = vld [vmem:[#allocation4 + $0x360] sm:$0xff]
    %v181 = vld [vmem:[#allocation4 + $0x368] sm:$0xff]
    %v182 = vld [vmem:[#allocation4 + $0x370] sm:$0xff]
    %v183 = vld [vmem:[#allocation4 + $0x378] sm:$0xff]
    %v184 = vld [vmem:[#allocation4 + $0x380] sm:$0xff]
    %v185 = vld [vmem:[#allocation4 + $0x388] sm:$0xff]
    %v186 = vld [vmem:[#allocation4 + $0x390] sm:$0xff]
    %v187 = vld [vmem:[#allocation4 + $0x398] sm:$0xff]
    %v188 = vld [vmem:[#allocation4 + $0x3a0] sm:$0xff]
    %v189 = vld [vmem:[#allocation4 + $0x3a8] sm:$0xff]
    %v190 = vld [vmem:[#allocation4 + $0x3b0] sm:$0xff]
    %v191 = vld [vmem:[#allocation4 + $0x3b8] sm:$0xff]
    %v192 = vld [vmem:[#allocation4 + $0x3c0] sm:$0xff]
    %v193 = vld [vmem:[#allocation4 + $0x3c8] sm:$0xff]
    %v194 = vld [vmem:[#allocation4 + $0x3d0] sm:$0xff]
    %v195 = vld [vmem:[#allocation4 + $0x3d8] sm:$0xff]
    %v196 = vld [vmem:[#allocation4 + $0x3e0] sm:$0xff]
    %v197 = vld [vmem:[#allocation4 + $0x3e8] sm:$0xff]
    %v198 = vld [vmem:[#allocation4 + $0x3f0] sm:$0xff]
    %v199 = vld [vmem:[#allocation4 + $0x3f8] sm:$0xff]
    %v200 = vld [vmem:[%s3] sm:$0xf]
    %v202 = vlaneseq
    %v203 = vshrl.u32 %v202, 7
    %v204 = vsub.s32 0, %v203
    %v205 = vrot.slane %v71, %v204
    %v206 = vlaneseq
    %v207 = vshrl.u32 %v206, 7
    %v208 = vsub.s32 1, %v207
    %v209 = vrot.slane %v71, %v208
    %v213 = vlaneseq
    %v214 = vshrl.u32 %v213, 7
    %v215 = vsub.s32 0, %v214
    %v216 = vrot.slane %v200, %v215
    %v217 = vlaneseq
    %v218 = vshrl.u32 %v217, 7
    %v219 = vsub.s32 1, %v218
    %v220 = vrot.slane %v200, %v219
    %v221 = vlaneseq
    %v222 = vshrl.u32 %v221, 7
    %v223 = vsub.s32 2, %v222
    %v224 = vrot.slane %v200, %v223
    %v225 = vlaneseq
    %v226 = vshrl.u32 %v225, 7
    %v227 = vsub.s32 3, %v226
    %v228 = vrot.slane %v200, %v227
    %233 = vmatprep.subr.mxu0 %v133
    %234 = vmatpush1.msra.mxu0 %v132
    %235 = vmatprep.subr.mxu0 %v129
    %236 = vmatpush1.msra.mxu0 %v128
    %237 = vmatprep.subr.mxu0 %v125
    %238 = vmatpush1.msra.mxu0 %v124
    %239 = vmatprep.subr.mxu0 %v121
    %240 = vmatpush1.msra.mxu0 %v120
    %241 = vmatprep.subr.mxu0 %v117
    %242 = vmatpush1.msra.mxu0 %v116
    %243 = vmatprep.subr.mxu0 %v113
    %244 = vmatpush1.msra.mxu0 %v112
    %245 = vmatprep.subr.mxu0 %v109
    %246 = vmatpush1.msra.mxu0 %v108
    %247 = vmatprep.subr.mxu0 %v105
    %248 = vmatpush1.msra.mxu0 %v104
    %249 = vmatprep.subr.mxu0 %v101
    %250 = vmatpush1.msra.mxu0 %v100
    %251 = vmatprep.subr.mxu0 %v97
    %252 = vmatpush1.msra.mxu0 %v96
    %253 = vmatprep.subr.mxu0 %v93
    %254 = vmatpush1.msra.mxu0 %v92
    %255 = vmatprep.subr.mxu0 %v89
    %256 = vmatpush1.msra.mxu0 %v88
    %257 = vmatprep.subr.mxu0 %v85
    %258 = vmatpush1.msra.mxu0 %v84
    %259 = vmatprep.subr.mxu0 %v81
    %260 = vmatpush1.msra.mxu0 %v80
    %261 = vmatprep.subr.mxu0 %v77
    %262 = vmatpush1.msra.mxu0 %v76
    %263 = vmatprep.subr.mxu0 %v73
    %264 = vmatpush1.msra.mxu0 %v72
    %265 = vmatprep.subr.mxu0 %v197
    %266 = vmatpush2.msra.mxu0 %v196
    %267 = vmatprep.subr.mxu0 %v193
    %268 = vmatpush2.msra.mxu0 %v192
    %269 = vmatprep.subr.mxu0 %v189
    %270 = vmatpush2.msra.mxu0 %v188
    %271 = vmatprep.subr.mxu0 %v185
    %272 = vmatpush2.msra.mxu0 %v184
    %273 = vmatprep.subr.mxu0 %v181
    %274 = vmatpush2.msra.mxu0 %v180
    %275 = vmatprep.subr.mxu0 %v177
    %276 = vmatpush2.msra.mxu0 %v176
    %277 = vmatprep.subr.mxu0 %v173
    %278 = vmatpush2.msra.mxu0 %v172
    %279 = vmatprep.subr.mxu0 %v169
    %280 = vmatpush2.msra.mxu0 %v168
    %281 = vmatprep.subr.mxu0 %v165
    %282 = vmatpush2.msra.mxu0 %v164
    %283 = vmatprep.subr.mxu0 %v161
    %284 = vmatpush2.msra.mxu0 %v160
    %285 = vmatprep.subr.mxu0 %v157
    %286 = vmatpush2.msra.mxu0 %v156
    %287 = vmatprep.subr.mxu0 %v153
    %288 = vmatpush2.msra.mxu0 %v152
    %289 = vmatprep.subr.mxu0 %v149
    %290 = vmatpush2.msra.mxu0 %v148
    %291 = vmatprep.subr.mxu0 %v145
    %292 = vmatpush2.msra.mxu0 %v144
    %293 = vmatprep.subr.mxu0 %v141
    %294 = vmatpush2.msra.mxu0 %v140
    %295 = vmatprep.subr.mxu0 %v137
    %296 = vmatpush2.msra.mxu0 %v136
    %297 = vmatprep.mubr.f32.mxu0 %v209
    %298 = vmatmul.mubr.f32.gmra.mxu0 %v205
    %v299 = vpop.f32.mrf.mxu0
    %v300 = vadd.f32 %v216, %v299
    %v301 = vpop.f32.mrf.mxu0
    %v302 = vadd.f32 %v220, %v301
    %303 = vdwg.mxu0
    %304 = vmatprep.subr.mxu0 %v135
    %305 = vmatpush1.msra.mxu0 %v134
    %306 = vmatprep.subr.mxu0 %v131
    %307 = vmatpush1.msra.mxu0 %v130
    %308 = vmatprep.subr.mxu0 %v127
    %309 = vmatpush1.msra.mxu0 %v126
    %310 = vmatprep.subr.mxu0 %v123
    %311 = vmatpush1.msra.mxu0 %v122
    %312 = vmatprep.subr.mxu0 %v119
    %313 = vmatpush1.msra.mxu0 %v118
    %314 = vmatprep.subr.mxu0 %v115
    %315 = vmatpush1.msra.mxu0 %v114
    %316 = vmatprep.subr.mxu0 %v111
    %317 = vmatpush1.msra.mxu0 %v110
    %318 = vmatprep.subr.mxu0 %v107
    %319 = vmatpush1.msra.mxu0 %v106
    %320 = vmatprep.subr.mxu0 %v103
    %321 = vmatpush1.msra.mxu0 %v102
    %322 = vmatprep.subr.mxu0 %v99
    %323 = vmatpush1.msra.mxu0 %v98
    %324 = vmatprep.subr.mxu0 %v95
    %325 = vmatpush1.msra.mxu0 %v94
    %326 = vmatprep.subr.mxu0 %v91
    %327 = vmatpush1.msra.mxu0 %v90
    %328 = vmatprep.subr.mxu0 %v87
    %329 = vmatpush1.msra.mxu0 %v86
    %330 = vmatprep.subr.mxu0 %v83
    %331 = vmatpush1.msra.mxu0 %v82
    %332 = vmatprep.subr.mxu0 %v79
    %333 = vmatpush1.msra.mxu0 %v78
    %334 = vmatprep.subr.mxu0 %v75
    %335 = vmatpush1.msra.mxu0 %v74
    %336 = vmatprep.subr.mxu0 %v199
    %337 = vmatpush2.msra.mxu0 %v198
    %338 = vmatprep.subr.mxu0 %v195
    %339 = vmatpush2.msra.mxu0 %v194
    %340 = vmatprep.subr.mxu0 %v191
    %341 = vmatpush2.msra.mxu0 %v190
    %342 = vmatprep.subr.mxu0 %v187
    %343 = vmatpush2.msra.mxu0 %v186
    %344 = vmatprep.subr.mxu0 %v183
    %345 = vmatpush2.msra.mxu0 %v182
    %346 = vmatprep.subr.mxu0 %v179
    %347 = vmatpush2.msra.mxu0 %v178
    %348 = vmatprep.subr.mxu0 %v175
    %349 = vmatpush2.msra.mxu0 %v174
    %350 = vmatprep.subr.mxu0 %v171
    %351 = vmatpush2.msra.mxu0 %v170
    %352 = vmatprep.subr.mxu0 %v167
    %353 = vmatpush2.msra.mxu0 %v166
    %354 = vmatprep.subr.mxu0 %v163
    %355 = vmatpush2.msra.mxu0 %v162
    %356 = vmatprep.subr.mxu0 %v159
    %357 = vmatpush2.msra.mxu0 %v158
    %358 = vmatprep.subr.mxu0 %v155
    %359 = vmatpush2.msra.mxu0 %v154
    %360 = vmatprep.subr.mxu0 %v151
    %361 = vmatpush2.msra.mxu0 %v150
    %362 = vmatprep.subr.mxu0 %v147
    %363 = vmatpush2.msra.mxu0 %v146
    %364 = vmatprep.subr.mxu0 %v143
    %365 = vmatpush2.msra.mxu0 %v142
    %366 = vmatprep.subr.mxu0 %v139
    %367 = vmatpush2.msra.mxu0 %v138
    %368 = vmatprep.mubr.f32.mxu0 %v209
    %369 = vmatmul.mubr.f32.gmra.mxu0 %v205
    %v370 = vpop.f32.mrf.mxu0
    %v371 = vadd.f32 %v224, %v370
    %v372 = vpop.f32.mrf.mxu0
    %v373 = vadd.f32 %v228, %v372
    %374 = vdwg.mxu0
    %v375 = vxor.u32 %v300, 2147483648
    %v376 = vmul.f32 %v375, 1.442695
    %v377 = vpow.pop %v376
    %v378 = vadd.f32 %v377, 1.0
    %v379 = vrcp.pop %v378
    %v380 = vmul.f32 1.0, %v379
    %v381 = vxor.u32 %v302, 2147483648
    %v382 = vmul.f32 %v381, 1.442695
    %v383 = vpow.pop %v382
    %v384 = vadd.f32 %v383, 1.0
    %v385 = vrcp.pop %v384
    %v386 = vmul.f32 1.0, %v385
    %v387 = vmul.f32 %v380, %v373
    %v388 = vadd.f32 %v371, %v387
    %v389 = vtanh.pop %v388
    %v390 = vsub.f32 1.0, %v386
    %v391 = vmul.f32 %v390, %v389
    %v392 = vmul.f32 %v386, %v70
    %v393 = vadd.f32 %v391, %v392
    %v394 = vld [vmem:[#allocation7] sm:$0xff]
    %v395 = vld [vmem:[#allocation7 + $0x8] sm:$0xff]
    %v396 = vld [vmem:[#allocation7 + $0x10] sm:$0xff]
    %v397 = vld [vmem:[#allocation7 + $0x18] sm:$0xff]
    %v398 = vld [vmem:[#allocation7 + $0x20] sm:$0xff]
    %v399 = vld [vmem:[#allocation7 + $0x28] sm:$0xff]
    %v400 = vld [vmem:[#allocation7 + $0x30] sm:$0xff]
    %v401 = vld [vmem:[#allocation7 + $0x38] sm:$0xff]
    %v402 = vld [vmem:[#allocation7 + $0x40] sm:$0xff]
    %v403 = vld [vmem:[#allocation7 + $0x48] sm:$0xff]
    %v404 = vld [vmem:[#allocation7 + $0x50] sm:$0xff]
    %v405 = vld [vmem:[#allocation7 + $0x58] sm:$0xff]
    %v406 = vld [vmem:[#allocation7 + $0x60] sm:$0xff]
    %v407 = vld [vmem:[#allocation7 + $0x68] sm:$0xff]
    %v408 = vld [vmem:[#allocation7 + $0x70] sm:$0xff]
    %v409 = vld [vmem:[#allocation7 + $0x78] sm:$0xff]
    %v410 = vld [vmem:[%s5] sm:$0x1]
    %411 = vmatprep.subr.mxu0 0.0
    %412 = vmatpush1.msra.mxu0 %v409
    %413 = vmatprep.subr.mxu0 0.0
    %414 = vmatpush1.msra.mxu0 %v408
    %415 = vmatprep.subr.mxu0 0.0
    %416 = vmatpush1.msra.mxu0 %v407
    %417 = vmatprep.subr.mxu0 0.0
    %418 = vmatpush1.msra.mxu0 %v406
    %419 = vmatprep.subr.mxu0 0.0
    %420 = vmatpush1.msra.mxu0 %v405
    %421 = vmatprep.subr.mxu0 0.0
    %422 = vmatpush1.msra.mxu0 %v404
    %423 = vmatprep.subr.mxu0 0.0
    %424 = vmatpush1.msra.mxu0 %v403
    %425 = vmatprep.subr.mxu0 0.0
    %426 = vmatpush1.msra.mxu0 %v402
    %427 = vmatprep.subr.mxu0 0.0
    %428 = vmatpush1.msra.mxu0 %v401
    %429 = vmatprep.subr.mxu0 0.0
    %430 = vmatpush1.msra.mxu0 %v400
    %431 = vmatprep.subr.mxu0 0.0
    %432 = vmatpush1.msra.mxu0 %v399
    %433 = vmatprep.subr.mxu0 0.0
    %434 = vmatpush1.msra.mxu0 %v398
    %435 = vmatprep.subr.mxu0 0.0
    %436 = vmatpush1.msra.mxu0 %v397
    %437 = vmatprep.subr.mxu0 0.0
    %438 = vmatpush1.msra.mxu0 %v396
    %439 = vmatprep.subr.mxu0 0.0
    %440 = vmatpush1.msra.mxu0 %v395
    %441 = vmatprep.subr.mxu0 0.0
    %442 = vmatpush1.msra.mxu0 %v394
    %443 = vmatprep.subr.mxu0 0.0
    %444 = vmatpush2.msra.mxu0 0.0
    %445 = vmatprep.subr.mxu0 0.0
    %446 = vmatpush2.msra.mxu0 0.0
    %447 = vmatprep.subr.mxu0 0.0
    %448 = vmatpush2.msra.mxu0 0.0
    %449 = vmatprep.subr.mxu0 0.0
    %450 = vmatpush2.msra.mxu0 0.0
    %451 = vmatprep.subr.mxu0 0.0
    %452 = vmatpush2.msra.mxu0 0.0
    %453 = vmatprep.subr.mxu0 0.0
    %454 = vmatpush2.msra.mxu0 0.0
    %455 = vmatprep.subr.mxu0 0.0
    %456 = vmatpush2.msra.mxu0 0.0
    %457 = vmatprep.subr.mxu0 0.0
    %458 = vmatpush2.msra.mxu0 0.0
    %459 = vmatprep.subr.mxu0 0.0
    %460 = vmatpush2.msra.mxu0 0.0
    %461 = vmatprep.subr.mxu0 0.0
    %462 = vmatpush2.msra.mxu0 0.0
    %463 = vmatprep.subr.mxu0 0.0
    %464 = vmatpush2.msra.mxu0 0.0
    %465 = vmatprep.subr.mxu0 0.0
    %466 = vmatpush2.msra.mxu0 0.0
    %467 = vmatprep.subr.mxu0 0.0
    %468 = vmatpush2.msra.mxu0 0.0
    %469 = vmatprep.subr.mxu0 0.0
    %470 = vmatpush2.msra.mxu0 0.0
    %471 = vmatprep.subr.mxu0 0.0
    %472 = vmatpush2.msra.mxu0 0.0
    %473 = vmatprep.subr.mxu0 0.0
    %474 = vmatpush2.msra.mxu0 0.0
    %475 = vmatprep.mubr.f32.mxu0 0.0
    %476 = vmatmul.mubr.f32.gmra.mxu0 %v393
    %v477 = vpop.f32.mrf.mxu0
    %v478 = vadd.f32 %v410, %v477
    %v479 = vpop.f32.mrf.mxu0
    %480 = vdwg.mxu0
    %481 = vst [vmem:[#allocation9] sm:$0x1] %v478
    %vm482 = vcmask 1040384
    %v483 = vsel %vm482, %v478, -inf
    %484 = vmax.xlane.f32.xlu0 %v483
    %v485 = vpop.xlane.xlu0 %484
    %vm486 = vcmp.ge.f32.partialorder %v478, %v485
    %v487 = vsel %vm486, %v57, 128
    %v488 = vsel %vm482, %v487, 2147483647
    %v489 = vand.u32 %v488, 65535
    %v490 = vshra.s32 %v488, 16
    %v491 = vcvt.s32.f32 %v489
    %v492 = vcvt.s32.f32 %v490
    %493 = vmin.xlane.f32.xlu0 %v492
    %v494 = vpop.xlane.xlu0 %493
    %vm495 = vcmp.eq.f32.partialorder %v492, %v494
    %v496 = vsel %vm495, %v491, inf
    %497 = vmin.xlane.f32.xlu0 %v496
    %v498 = vpop.xlane.xlu0 %497
    %v499 = vcvt.f32.s32 %v498
    %v500 = vcvt.f32.s32 %v494
    %v501 = vshll.u32 %v500, 16
    %v502 = vadd.s32 %v501, %v499
    %vm503 = vcmp.eq.s32.totalorder %v57, %v502
    %v504 = vsel %vm503, 1, 0
    %v505 = vcvt.s32.f32 %v504
    %506 = vst.msk [vmem:[#allocation2] sm:$0x1] %vm66, %v505
    %507 = vst.msk [vmem:[#allocation2 + $0x1] sm:$0x1] %vm66, %v393
    %508 = vst [vmem:[#allocation10] sm:$0x1] %v393
    %v509 = vld [vmem:[#allocation9] sm:$0x1]
    %v510 = vsel %vm482, %v509, -inf
    %511 = vmax.xlane.f32.xlu0 %v510
    %v512 = vpop.xlane.xlu0 %511
    %v513 = vsub.f32 %v509, %v512
    %v514 = vmul.f32 %v513, 1.442695
    %v515 = vpow.pop %v514
    %v516 = vsel %vm482, %v515, 0.0
    %517 = vadd.xlane.f32.xlu0 %v516
    %v518 = vpop.xlane.xlu0 %517
    %v519 = vlog2.pop %v518
    %v520 = vmul.f32 %v519, 0.6931472
    %v521 = vadd.f32 %v512, %v520
    %v522 = vsub.f32 %v509, %v521
    %523 = vst [vmem:[#allocation9] sm:$0x1] %v522
    // Predicated region
    $region34: #{tpu_custom_call.1} parent=1 // pred_check
      _
    $region35: #{tpu_custom_call.1} parent=1 // pred_check_branch
      %525 = sbr.rel (0) target = $region37
    $region36: #{tpu_custom_call.1} parent=1 // pred_region
      %s527 = ssub.s32 16, 16
      %528 = vsyncadd [#allocation6], %s527
      %s530 = sshll.u32 [#allocation9], 4
      %s531 = int_to_ptr.vmem [resolvable:$true] %s530
      %533 = dma.vmem_to_hbm [thread:$0]  %s531, 16, %s6, [#allocation6]
    $region37: #{tpu_custom_call.1} parent=1 // pred_fallthru
      _
    // Predicated region
    $region38: #{tpu_custom_call.1} parent=1 // pred_check
      _
    $region39: #{tpu_custom_call.1} parent=1 // pred_check_branch
      %535 = sbr.rel (0) target = $region41
    $region40: #{tpu_custom_call.1} parent=1 // pred_region
      %s537 = ssub.s32 16, 16
      %538 = vsyncadd [#allocation11], %s537
      %s540 = sshll.u32 [#allocation10], 4
      %s541 = int_to_ptr.vmem [resolvable:$true] %s540
      %543 = dma.vmem_to_hbm [thread:$0]  %s541, 16, %s7, [#allocation11]
    $region41: #{tpu_custom_call.1} parent=1 // pred_fallthru
      _
    // Predicated region
    $region42: #{tpu_custom_call.1} parent=1 // pred_check
      _
    $region43: #{tpu_custom_call.1} parent=1 // pred_check_branch
      %545 = sbr.rel (0) target = $region45
    $region44: #{tpu_custom_call.1} parent=1 // pred_region
      %546 = dma.done [#allocation6], 16
    $region45: #{tpu_custom_call.1} parent=1 // pred_fallthru
      _
    // Predicated region
    $region46: #{tpu_custom_call.1} parent=1 // pred_check
      _
    $region47: #{tpu_custom_call.1} parent=1 // pred_check_branch
      %548 = sbr.rel (0) target = $region49
    $region48: #{tpu_custom_call.1} parent=1 // pred_region
      %549 = dma.done [#allocation11], 16
    $region49: #{tpu_custom_call.1} parent=1 // pred_fallthru
      _
    %550 = vsyncpa [#allocation5], 1
    %551 = vsyncpa [#allocation8], 1
    %552 = vsyncpa [#allocation6], 1
    %553 = vsyncpa [#allocation11], 1

</llo_original>
